<compile_context>
chip_gen: v7x
topology: tpu7x:2x2x1
jax: 0.10.0
libtpu: 0.0.40
codegen_flags: <defaults>
</compile_context>

<pallas_src>
import jax
import jax.numpy as jnp
from jax.experimental import pallas as pl
from jax.experimental.pallas import tpu as pltpu

_LANE = 128
_SUBLANE = 8


def _round_up(x, m):
    return ((x + m - 1) // m) * m


def _largest_divisor_chunk(total, cap):
    """Largest divisor of `total` that is <= cap and a multiple of 8 (else `total`)."""
    if total <= cap:
        return total
    start = (min(cap, total) // _SUBLANE) * _SUBLANE
    for c in range(start, _SUBLANE - 1, -_SUBLANE):
        if total % c == 0:
            return c
    return total


def _net_kernel(l_ref, g_ref, w1l_ref, w1g_ref, b1_ref, w2_ref, b2_ref,
                out_ref, pool_ref):
    # l_ref:   [TB, TS, Dp]  lane-packed local features (one token chunk)
    # g_ref:   [TB, D]       global features
    # w1l_ref: [Dp, Hp]      1/S mean scale folded in, tiled k x along rows
    # w1g_ref: [D,  Hp]      b1_ref/b2_ref: [1, Hp]      w2_ref: [Hp, Hp]
    # out_ref: [TB, Hp]      pool_ref: [TB, Dp] f32 sum-pool accumulator (scratch)
    s = pl.program_id(2)

    @pl.when(s == 0)
    def _():
        pool_ref[...] = jnp.zeros_like(pool_ref)

    # f32 upcast BEFORE the sum so bf16-streamed inputs don't lose accuracy over S.
    pool_ref[...] += jnp.sum(l_ref[...].astype(jnp.float32), axis=1)

    @pl.when(s == pl.num_programs(2) - 1)
    def _():
        g = g_ref[...].astype(jnp.float32)
        # Layer 1 as two MXU dots accumulating in f32 (no lane-axis concat).
        h = jnp.dot(pool_ref[...], w1l_ref[...], preferred_element_type=jnp.float32)
        h = h + jnp.dot(g, w1g_ref[...], preferred_element_type=jnp.float32)
        h = jnp.maximum(h + b1_ref[...], 0.0)                       # ReLU
        out = jnp.dot(h, w2_ref[...], preferred_element_type=jnp.float32)
        out_ref[...] = (out + b2_ref[...]).astype(out_ref.dtype)    # lane-dense store


def net_wrapper_forward(l_f, e_l_f, g_f, e_g_f, params1, params2,
                        input_dtype=jnp.float32):
    """Pallas equivalent of NetWrapper.forward (both heads in one fused kernel)."""
    B, S, D = l_f.shape
    H = params1[3].shape[1]
    Hp = _round_up(max(H, _LANE), _LANE)          # lane-dense hidden / output width
    inv_s = 1.0 / float(S)

    # ---- lane packing: fold k tokens into the lane dim when D < 128 ------------
    k = 1
    if D < _LANE and _LANE % D == 0 and S % (_LANE // D) == 0:
        k = _LANE // D
    Dp = k * D
    Sp = S // k

    def pack_one(w1l, w1g, b1, w2, b2):
        w1l_p = jnp.tile(w1l * inv_s, (k, 1))                         # [Dp, H]
        w1l_p = jnp.pad(w1l_p, ((0, 0), (0, Hp - H)))                 # [Dp, Hp]
        w1g_p = jnp.pad(w1g, ((0, 0), (0, Hp - H)))                   # [D,  Hp]
        b1_p = jnp.pad(jnp.reshape(b1, (1, H)), ((0, 0), (0, Hp - H)))
        w2_p = jnp.pad(w2, ((0, Hp - H), (0, Hp - H)))                # [Hp, Hp]
        b2_p = jnp.pad(jnp.reshape(b2, (1, H)), ((0, 0), (0, Hp - H)))
        return w1l_p, w1g_p, b1_p, w2_p, b2_p

    packed = [pack_one(*params1), pack_one(*params2)]
    w1l_s, w1g_s, b1_s, w2_s, b2_s = (jnp.stack(t) for t in zip(*packed))

    l_s = jnp.stack([l_f, e_l_f]).astype(input_dtype)                 # [2, B, S, D]
    l_s = l_s.reshape(2, B, Sp, Dp)                                   # lane packing
    g_s = jnp.stack([g_f, e_g_f]).astype(input_dtype)                 # [2, B, D]

    # ---- generation-aware VMEM budget -> token chunk / batch tile --------------
    try:
        vmem_cap = int(pltpu.get_tpu_info().vmem_capacity_bytes)
    except Exception:
        vmem_cap = 64 * 1024 * 1024
    vmem_limit = int(min((vmem_cap * 3) // 4, 100 * 1024 * 1024))

    itemsize = jnp.dtype(input_dtype).itemsize
    TS = _largest_divisor_chunk(Sp, 1024)                             # token chunk
    ns = Sp // TS
    # Double-buffered l tile dominates VMEM; give it ~half the budget.
    per_row = 2 * _round_up(TS, _SUBLANE) * _round_up(Dp, _LANE) * itemsize
    tb_cap = max(_SUBLANE, ((vmem_limit // 2) // per_row) // _SUBLANE * _SUBLANE)
    TB = B if B <= tb_cap else tb_cap
    nb = pl.cdiv(B, TB)

    flops = 2 * (B * S * D + 2 * B * Dp * Hp + 2 * B * D * Hp + 2 * B * Hp * Hp)
    bytes_accessed = (l_s.size + g_s.size) * itemsize + 4 * (
        w1l_s.size + w1g_s.size + b1_s.size + w2_s.size + b2_s.size + 2 * B * Hp)

    out = pl.pallas_call(
        _net_kernel,
        out_shape=jax.ShapeDtypeStruct((2, B, Hp), jnp.float32),
        grid=(2, nb, ns),
        in_specs=[
            pl.BlockSpec((None, TB, TS, Dp), lambda n, b, s: (n, b, s, 0)),  # local feats
            pl.BlockSpec((None, TB, D), lambda n, b, s: (n, b, 0)),          # global feats
            pl.BlockSpec((None, Dp, Hp), lambda n, b, s: (n, 0, 0)),         # W1 (local)
            pl.BlockSpec((None, D, Hp), lambda n, b, s: (n, 0, 0)),          # W1 (global)
            pl.BlockSpec((None, 1, Hp), lambda n, b, s: (n, 0, 0)),          # b1
            pl.BlockSpec((None, Hp, Hp), lambda n, b, s: (n, 0, 0)),         # W2
            pl.BlockSpec((None, 1, Hp), lambda n, b, s: (n, 0, 0)),          # b2
        ],
        out_specs=pl.BlockSpec((None, TB, Hp), lambda n, b, s: (n, b, 0)),
        scratch_shapes=[pltpu.VMEM((TB, Dp), jnp.float32)],                  # sum-pool acc
        compiler_params=pltpu.CompilerParams(
            dimension_semantics=("parallel", "parallel", "arbitrary"),
            vmem_limit_bytes=vmem_limit,
        ),
        cost_estimate=pl.CostEstimate(
            flops=int(flops), transcendentals=0, bytes_accessed=int(bytes_accessed)),
    )(l_s, g_s, w1l_s, w1g_s, b1_s, w2_s, b2_s)

    out = out[:, :, :H]                                   # drop lane padding
    return out[0], out[1]


def make_params(key, D, H):
    """Deterministic parameter init for one projection head."""
    k1, k2, k3 = jax.random.split(key, 3)
    scale1 = 1.0 / jnp.sqrt(2.0 * D)
    scale2 = 1.0 / jnp.sqrt(float(H))
    w1l = jax.random.normal(k1, (D, H), jnp.float32) * scale1
    w1g = jax.random.normal(k2, (D, H), jnp.float32) * scale1
    b1 = jnp.zeros((1, H), jnp.float32)
    w2 = jax.random.normal(k3, (H, H), jnp.float32) * scale2
    b2 = jnp.zeros((1, H), jnp.float32)
    return (w1l, w1g, b1, w2, b2)


if __name__ == "__main__":
    B, S, D, H = 8, 8, 32, 32

    key = jax.random.PRNGKey(0)
    k_lf, k_elf, k_gf, k_egf, k_p1, k_p2 = jax.random.split(key, 6)

    l_f = jax.random.normal(k_lf, (B, S, D), jnp.float32)
    e_l_f = jax.random.normal(k_elf, (B, S, D), jnp.float32)
    g_f = jax.random.normal(k_gf, (B, D), jnp.float32)
    e_g_f = jax.random.normal(k_egf, (B, D), jnp.float32)

    params1 = make_params(k_p1, D, H)
    params2 = make_params(k_p2, D, H)

    def ref_net(l, g, p):
        w1l, w1g, b1, w2, b2 = p
        h = jnp.maximum(jnp.mean(l, axis=1) @ w1l + g @ w1g + b1, 0.0)
        return h @ w2 + b2

    # f32 streaming path (exact vs reference).
    rep1, rep2 = net_wrapper_forward(l_f, e_l_f, g_f, e_g_f, params1, params2)
    jax.block_until_ready((rep1, rep2))
    assert rep1.shape == (B, H) and rep2.shape == (B, H)
    assert jnp.allclose(rep1, ref_net(l_f, g_f, params1), atol=1e-4, rtol=1e-4)
    assert jnp.allclose(rep2, ref_net(e_l_f, e_g_f, params2), atol=1e-4, rtol=1e-4)

    # bf16 HBM streaming path (production lever: halves the dominant l/g DMA traffic;
    # in-kernel math stays f32). Checked against the bf16-rounded-input reference.
    rep1b, rep2b = net_wrapper_forward(l_f, e_l_f, g_f, e_g_f, params1, params2,
                                       input_dtype=jnp.bfloat16)
    jax.block_until_ready((rep1b, rep2b))
    bf = lambda x: x.astype(jnp.bfloat16).astype(jnp.float32)
    assert jnp.allclose(rep1b, ref_net(bf(l_f), bf(g_f), params1), atol=1e-3, rtol=1e-3)
    assert jnp.allclose(rep2b, ref_net(bf(e_l_f), bf(e_g_f), params2), atol=1e-3, rtol=1e-3)

    print("KERNEL_OK")
</pallas_src>

<mosaic_0001>
module attributes {stable_mosaic.version = 11 : i64} {
  func.func @_net_kernel(%arg0: i32, %arg1: i32, %arg2: i32, %arg3: memref<1x8x2x128xf32, #tpu.memory_space<vmem>>, %arg4: memref<1x8x32xf32, #tpu.memory_space<vmem>>, %arg5: memref<1x128x128xf32, #tpu.memory_space<vmem>>, %arg6: memref<1x32x128xf32, #tpu.memory_space<vmem>>, %arg7: memref<1x1x128xf32, #tpu.memory_space<vmem>>, %arg8: memref<1x128x128xf32, #tpu.memory_space<vmem>>, %arg9: memref<1x1x128xf32, #tpu.memory_space<vmem>>, %arg10: memref<1x8x128xf32, #tpu.memory_space<vmem>>, %arg11: memref<8x128xf32, #tpu.memory_space<vmem>>) attributes {dimension_semantics = [#tpu.dimension_semantics<parallel>, #tpu.dimension_semantics<parallel>, #tpu.dimension_semantics<arbitrary>], iteration_bounds = array<i64: 2, 1, 1>, scalar_prefetch = 0 : i64, scratch_operands = 1 : i64, tpu.core_type = #tpu.core_type<tc>, window_params = [{transform_indices = @transform_0, window_bounds = array<i64: 1, 8, 2, 128>}, {transform_indices = @transform_1, window_bounds = array<i64: 1, 8, 32>}, {transform_indices = @transform_2, window_bounds = array<i64: 1, 128, 128>}, {transform_indices = @transform_3, window_bounds = array<i64: 1, 32, 128>}, {transform_indices = @transform_4, window_bounds = array<i64: 1, 1, 128>}, {transform_indices = @transform_5, window_bounds = array<i64: 1, 128, 128>}, {transform_indices = @transform_6, window_bounds = array<i64: 1, 1, 128>}, {transform_indices = @transform_7, window_bounds = array<i64: 1, 8, 128>}]} {
    %c0_i32 = arith.constant 0 : i32
    %0 = arith.cmpi eq, %arg2, %c0_i32 : i32
    %1 = arith.extui %0 : i1 to i32
    %c0_i32_0 = arith.constant 0 : i32
    %2 = arith.cmpi ne, %1, %c0_i32_0 : i32
    scf.if %2 {
      %cst_10 = arith.constant 0.000000e+00 : f32
      %12 = vector.broadcast %cst_10 : f32 to vector<8x128xf32>
      %c0_11 = arith.constant 0 : index
      %c0_12 = arith.constant 0 : index
      %13 = vector.load %arg11[%c0_11, %c0_12] : memref<8x128xf32, #tpu.memory_space<vmem>>, vector<8x128xf32>
      tpu.vector_store %arg11[%c0_11, %c0_12], %12 {strides = array<i32>} : memref<8x128xf32, #tpu.memory_space<vmem>>, vector<8x128xf32>,
    } else {
    }
    %c0 = arith.constant 0 : index
    %c0_1 = arith.constant 0 : index
    %3 = vector.load %arg11[%c0, %c0_1] : memref<8x128xf32, #tpu.memory_space<vmem>>, vector<8x128xf32>
    %c0_2 = arith.constant 0 : index
    %c0_3 = arith.constant 0 : index
    %c0_4 = arith.constant 0 : index
    %c0_5 = arith.constant 0 : index
    %4 = vector.load %arg3[%c0_2, %c0_3, %c0_4, %c0_5] : memref<1x8x2x128xf32, #tpu.memory_space<vmem>>, vector<1x8x2x128xf32>
    %5 = vector.shape_cast %4 : vector<1x8x2x128xf32> to vector<8x2x128xf32>
    %cst = arith.constant dense<0.000000e+00> : vector<8x128xf32>
    %6 = vector.multi_reduction <add>, %5, %cst [1] : vector<8x2x128xf32> to vector<8x128xf32>
    %7 = arith.addf %3, %6 : vector<8x128xf32>
    %c0_6 = arith.constant 0 : index
    %c0_7 = arith.constant 0 : index
    %8 = vector.load %arg11[%c0_6, %c0_7] : memref<8x128xf32, #tpu.memory_space<vmem>>, vector<8x128xf32>
    tpu.vector_store %arg11[%c0_6, %c0_7], %7 {strides = array<i32>} : memref<8x128xf32, #tpu.memory_space<vmem>>, vector<8x128xf32>,
    %c0_i32_8 = arith.constant 0 : i32
    %9 = arith.cmpi eq, %arg2, %c0_i32_8 : i32
    %10 = arith.extui %9 : i1 to i32
    %c0_i32_9 = arith.constant 0 : i32
    %11 = arith.cmpi ne, %10, %c0_i32_9 : i32
    scf.if %11 {
      %c0_10 = arith.constant 0 : index
      %c0_11 = arith.constant 0 : index
      %c0_12 = arith.constant 0 : index
      %12 = vector.load %arg4[%c0_10, %c0_11, %c0_12] : memref<1x8x32xf32, #tpu.memory_space<vmem>>, vector<1x8x32xf32>
      %13 = vector.shape_cast %12 : vector<1x8x32xf32> to vector<8x32xf32>
      %c0_13 = arith.constant 0 : index
      %c0_14 = arith.constant 0 : index
      %14 = vector.load %arg11[%c0_13, %c0_14] : memref<8x128xf32, #tpu.memory_space<vmem>>, vector<8x128xf32>
      %c0_15 = arith.constant 0 : index
      %c0_16 = arith.constant 0 : index
      %c0_17 = arith.constant 0 : index
      %15 = vector.load %arg5[%c0_15, %c0_16, %c0_17] : memref<1x128x128xf32, #tpu.memory_space<vmem>>, vector<1x128x128xf32>
      %16 = vector.shape_cast %15 : vector<1x128x128xf32> to vector<128x128xf32>
      %cst_18 = arith.constant dense<0.000000e+00> : vector<8x128xf32>
      %17 = tpu.matmul %14, %16, %cst_18 {dimension_numbers = #tpu.dot_dimension_numbers<[1], [0], [0], [1], [0, 0, 1, 1], [], []>} : vector<8x128xf32>, vector<128x128xf32>, vector<8x128xf32> -> vector<8x128xf32>
      %c0_19 = arith.constant 0 : index
      %c0_20 = arith.constant 0 : index
      %c0_21 = arith.constant 0 : index
      %18 = vector.load %arg6[%c0_19, %c0_20, %c0_21] : memref<1x32x128xf32, #tpu.memory_space<vmem>>, vector<1x32x128xf32>
      %19 = vector.shape_cast %18 : vector<1x32x128xf32> to vector<32x128xf32>
      %cst_22 = arith.constant dense<0.000000e+00> : vector<8x128xf32>
      %20 = tpu.matmul %13, %19, %cst_22 {dimension_numbers = #tpu.dot_dimension_numbers<[1], [0], [0], [1], [0, 0, 1, 1], [], []>} : vector<8x32xf32>, vector<32x128xf32>, vector<8x128xf32> -> vector<8x128xf32>
      %21 = arith.addf %17, %20 : vector<8x128xf32>
      %c0_23 = arith.constant 0 : index
      %c0_24 = arith.constant 0 : index
      %c0_25 = arith.constant 0 : index
      %22 = vector.load %arg7[%c0_23, %c0_24, %c0_25] : memref<1x1x128xf32, #tpu.memory_space<vmem>>, vector<1x1x128xf32>
      %23 = vector.shape_cast %22 : vector<1x1x128xf32> to vector<1x128xf32>
      %24 = vector.broadcast %23 : vector<1x128xf32> to vector<8x128xf32>
      %25 = arith.addf %21, %24 : vector<8x128xf32>
      %cst_26 = arith.constant 0.000000e+00 : f32
      %26 = vector.broadcast %cst_26 : f32 to vector<8x128xf32>
      %27 = arith.maximumf %25, %26 : vector<8x128xf32>
      %c0_27 = arith.constant 0 : index
      %c0_28 = arith.constant 0 : index
      %c0_29 = arith.constant 0 : index
      %28 = vector.load %arg8[%c0_27, %c0_28, %c0_29] : memref<1x128x128xf32, #tpu.memory_space<vmem>>, vector<1x128x128xf32>
      %29 = vector.shape_cast %28 : vector<1x128x128xf32> to vector<128x128xf32>
      %cst_30 = arith.constant dense<0.000000e+00> : vector<8x128xf32>
      %30 = tpu.matmul %27, %29, %cst_30 {dimension_numbers = #tpu.dot_dimension_numbers<[1], [0], [0], [1], [0, 0, 1, 1], [], []>} : vector<8x128xf32>, vector<128x128xf32>, vector<8x128xf32> -> vector<8x128xf32>
      %c0_31 = arith.constant 0 : index
      %c0_32 = arith.constant 0 : index
      %c0_33 = arith.constant 0 : index
      %31 = vector.load %arg9[%c0_31, %c0_32, %c0_33] : memref<1x1x128xf32, #tpu.memory_space<vmem>>, vector<1x1x128xf32>
      %32 = vector.shape_cast %31 : vector<1x1x128xf32> to vector<1x128xf32>
      %33 = vector.broadcast %32 : vector<1x128xf32> to vector<8x128xf32>
      %34 = arith.addf %30, %33 : vector<8x128xf32>
      %c0_34 = arith.constant 0 : index
      %c0_35 = arith.constant 0 : index
      %c0_36 = arith.constant 0 : index
      %35 = vector.load %arg10[%c0_34, %c0_35, %c0_36] : memref<1x8x128xf32, #tpu.memory_space<vmem>>, vector<1x8x128xf32>
      %36 = vector.shape_cast %35 : vector<1x8x128xf32> to vector<8x128xf32>
      %37 = vector.shape_cast %34 : vector<8x128xf32> to vector<1x8x128xf32>
      tpu.vector_store %arg10[%c0_34, %c0_35, %c0_36], %37 {strides = array<i32>} : memref<1x8x128xf32, #tpu.memory_space<vmem>>, vector<1x8x128xf32>,
    } else {
    }
    return
  }
  func.func @transform_0(%arg0: i32, %arg1: i32, %arg2: i32) -> (i32, i32, i32, i32) {
    %c0_i32 = arith.constant 0 : i32
    %c0_i32_0 = arith.constant 0 : i32
    return %arg0, %arg1, %arg2, %c0_i32 : i32, i32, i32, i32
  }
  func.func @transform_1(%arg0: i32, %arg1: i32, %arg2: i32) -> (i32, i32, i32) {
    %c0_i32 = arith.constant 0 : i32
    %c0_i32_0 = arith.constant 0 : i32
    return %arg0, %arg1, %c0_i32 : i32, i32, i32
  }
  func.func @transform_2(%arg0: i32, %arg1: i32, %arg2: i32) -> (i32, i32, i32) {
    %c0_i32 = arith.constant 0 : i32
    %c0_i32_0 = arith.constant 0 : i32
    %c0_i32_1 = arith.constant 0 : i32
    return %arg0, %c0_i32, %c0_i32_0 : i32, i32, i32
  }
  func.func @transform_3(%arg0: i32, %arg1: i32, %arg2: i32) -> (i32, i32, i32) {
    %c0_i32 = arith.constant 0 : i32
    %c0_i32_0 = arith.constant 0 : i32
    %c0_i32_1 = arith.constant 0 : i32
    return %arg0, %c0_i32, %c0_i32_0 : i32, i32, i32
  }
  func.func @transform_4(%arg0: i32, %arg1: i32, %arg2: i32) -> (i32, i32, i32) {
    %c0_i32 = arith.constant 0 : i32
    %c0_i32_0 = arith.constant 0 : i32
    %c0_i32_1 = arith.constant 0 : i32
    return %arg0, %c0_i32, %c0_i32_0 : i32, i32, i32
  }
  func.func @transform_5(%arg0: i32, %arg1: i32, %arg2: i32) -> (i32, i32, i32) {
    %c0_i32 = arith.constant 0 : i32
    %c0_i32_0 = arith.constant 0 : i32
    %c0_i32_1 = arith.constant 0 : i32
    return %arg0, %c0_i32, %c0_i32_0 : i32, i32, i32
  }
  func.func @transform_6(%arg0: i32, %arg1: i32, %arg2: i32) -> (i32, i32, i32) {
    %c0_i32 = arith.constant 0 : i32
    %c0_i32_0 = arith.constant 0 : i32
    %c0_i32_1 = arith.constant 0 : i32
    return %arg0, %c0_i32, %c0_i32_0 : i32, i32, i32
  }
  func.func @transform_7(%arg0: i32, %arg1: i32, %arg2: i32) -> (i32, i32, i32) {
    %c0_i32 = arith.constant 0 : i32
    %c0_i32_0 = arith.constant 0 : i32
    return %arg0, %arg1, %c0_i32 : i32, i32, i32
  }
}

</mosaic_0001>

<llo_original>
// kernel: tpu_custom_call.1
$region0: #{tpu_custom_call.1}
  #allocation0 [shape = 'u32[]', space=smem, size = 0x4, offset = 0x4, fixed_abs, tag = 'smem constant byte address 0x4 - core index']
  #allocation1 [shape = 'u32[144,128]{1,0:T(1,128)}', space=vmem, size = 0x12000, scoped, tag = 'internal scratch']
  #allocation2 [shape = 'f32[8,128]{1,0:T(8,128)}', space=vmem, size = 0x1000, scoped, tag = 'scratch operand']
  %s0 = inlined_call_operand.hbm [shape: f32[2,8,2,128], index: 0, kind: input, shape index: {}]
  %s1 = inlined_call_operand.hbm [shape: f32[2,8,32], index: 1, kind: input, shape index: {}]
  %s2 = inlined_call_operand.hbm [shape: f32[2,128,128], index: 2, kind: input, shape index: {}]
  %s3 = inlined_call_operand.hbm [shape: f32[2,32,128], index: 3, kind: input, shape index: {}]
  %s4 = inlined_call_operand.vmem [shape: f32[2,1,128], index: 4, kind: input, shape index: {}]
  %s5 = inlined_call_operand.hbm [shape: f32[2,128,128], index: 5, kind: input, shape index: {}]
  %s6 = inlined_call_operand.vmem [shape: f32[2,1,128], index: 6, kind: input, shape index: {}]
  %s7 = inlined_call_operand.hbm [shape: f32[2,8,128], index: 7, kind: output, shape index: {}]
  %s8 = sld [smem:[#allocation0]]
  $region89: #{tpu_custom_call.1} parent=0
    _
  %s10 = ssub.s32 1, %s8
  %s11 = scalar_select 0, %s10, %s8
  $region1: #{tpu_custom_call.1} parent=0
    #allocation3 [shape = 'u8[16384]{0}', space=vmem, size = 0x4000, scoped, tag = 'input window, operand 0']
    #allocation4 [shape = 's32[2]{0}', space=sflag, size = 0x8, scoped, tag = 'scoped memory for tpu_custom_call.1']
    #allocation5 [shape = 's32[2]{0}', space=sflag, size = 0x8, scoped, tag = 'scoped memory for tpu_custom_call.1']
    #allocation6 [shape = 'u8[8192]{0}', space=vmem, size = 0x2000, scoped, tag = 'input window, operand 1']
    #allocation7 [shape = 's32[2]{0}', space=sflag, size = 0x8, scoped, tag = 'scoped memory for tpu_custom_call.1']
    #allocation8 [shape = 'u8[131072]{0}', space=vmem, size = 0x20000, scoped, tag = 'input window, operand 2']
    #allocation9 [shape = 'u8[32768]{0}', space=vmem, size = 0x8000, scoped, tag = 'input window, operand 3']
    #allocation10 [shape = 's32[2]{0}', space=sflag, size = 0x8, scoped, tag = 'scoped memory for tpu_custom_call.1']
    #allocation11 [shape = 'u8[131072]{0}', space=vmem, size = 0x20000, scoped, tag = 'input window, operand 5']
    #allocation12 [shape = 'u8[8192]{0}', space=vmem, size = 0x2000, scoped, tag = 'output window, operand 0']
    %12 = vsyncpa [#allocation4], 0
    %s13 = scalar_lea.sflag [#allocation4], 1
    %14 = vsyncpa %s13, 0
    %15 = vsyncpa [#allocation7], 0
    %s16 = scalar_lea.sflag [#allocation7], 1
    %17 = vsyncpa %s16, 0
    %18 = vsyncpa [#allocation10], 0
    %s19 = scalar_lea.sflag [#allocation10], 1
    %20 = vsyncpa %s19, 0
    %21 = vsyncpa [#allocation5], 0
    %s22 = scalar_lea.sflag [#allocation5], 1
    %23 = vsyncpa %s22, 0
    loop: start=0, step=1, limit=4
    $region2: #{tpu_custom_call.1} parent=1 // loop_pre_header
      _
    $region3: #{tpu_custom_call.1} parent=1 // loop_header
      %s25 = sphi 0, %s29
      %p26 = scmp.ge.s32.totalorder %s25, 4
      %s32 = sphi 0, %s51
      %s33 = sphi 0, %s47
      %s34 = sphi 0, %s43
      %s35 = sphi 0, %s32
      %s36 = sphi 0, %s33
      %s37 = sphi 0, %s34
      %s38 = sphi 0, %s35
      %s39 = sphi 0, %s36
      %s40 = sphi 0, %s37
      %s58 = sphi 0, %s60
      %s61 = sphi 0, %s58
      %s62 = sphi 0, %s61
      %s78 = sphi 0, %s62
      %s86 = sphi 0, %s88
      %s89 = sphi 0, %s86
      %s90 = sphi 0, %s89
      %s106 = sphi 0, %s90
      %s112 = sphi 0, %s114
      %s115 = sphi 0, %s112
      %s116 = sphi 0, %s115
      %s132 = sphi 0, %s116
      %s138 = sphi 0, %s140
      %s141 = sphi 0, %s138
      %s142 = sphi 0, %s141
      %s158 = sphi 0, %s142
      %s164 = sphi 0, %s166
      %s167 = sphi 0, %s164
      %s168 = sphi 0, %s167
      %s184 = sphi 0, %s168
      %s190 = sphi 0, %s192
      %s193 = sphi 0, %s190
      %s194 = sphi 0, %s193
      %s210 = sphi 0, %s194
      %s216 = sphi 0, %s218
      %s219 = sphi 0, %s216
      %s220 = sphi 0, %s219
      %s236 = sphi 0, %s220
      %s244 = sphi 0, %s246
      %s247 = sphi 0, %s244
      %s248 = sphi 0, %s247
      %s264 = sphi 0, %s248
    $region4: #{tpu_custom_call.1} parent=1 // loop_header_branch
      %28 = sbr.rel (%p26) target = $region8
    $region5: #{tpu_custom_call.1} parent=1 // loop_body
      %s30 = ssub.s32 %s25, 1
      %s31 = ssub.s32 %s25, 2
      %s41 = sadd.s32 1, %s34
      %p42 = scmp.ge.s32.totalorder %s41, 1
      %s43 = scalar_select %p42, 0, %s41
      %s44 = sadd.s32 1, %s33
      %s45 = scalar_select %p42, %s44, %s33
      %p46 = scmp.ge.s32.totalorder %s45, 1
      %s47 = scalar_select %p46, 0, %s45
      %s48 = sadd.s32 1, %s32
      %s49 = scalar_select %p46, %s48, %s32
      %p50 = scmp.ge.s32.totalorder %s49, 2
      %s51 = scalar_select %p50, 0, %s49
      %s52 = ssub.s32 %s32, %s51
      %s53 = ssub.s32 %s33, %s47
      %s54 = sor.u32 %s52, %s53
      %s55 = ssub.s32 %s34, %s43
      %s56 = sor.u32 %s54, %s55
      %p57 = scmp.eq.s32.totalorder %s56, 0
      %s59 = sadd.s32 %s58, 1
      %s60 = scalar_select %p57, %s58, %s59
      %p63 = pneg %p57
      %p64 = scmp.eq.s32.totalorder %s25, 1
      %p65 = por %p63, %p64
      %p66 = scmp.ne.s32.totalorder %s58, %s61
      %p67 = scmp.eq.s32.totalorder %s25, 0
      %p68 = por %p66, %p67
      %p69 = scmp.ne.s32.totalorder %s58, %s61
      %p70 = scmp.eq.s32.totalorder %s30, 1
      %p71 = por %p69, %p70
      %p72 = scmp.ne.s32.totalorder %s61, %s62
      %p73 = scmp.eq.s32.totalorder %s30, 0
      %p74 = por %p72, %p73
      %p75 = scmp.ne.s32.totalorder %s61, %s62
      %p76 = scmp.eq.s32.totalorder %s31, 1
      %p77 = por %p75, %p76
      %p79 = scmp.ne.s32.totalorder %s62, %s78
      %p80 = scmp.eq.s32.totalorder %s31, 0
      %p81 = por %p79, %p80
      %s82 = ssub.s32 %s32, %s51
      %s83 = ssub.s32 %s33, %s47
      %s84 = sor.u32 %s82, %s83
      %p85 = scmp.eq.s32.totalorder %s84, 0
      %s87 = sadd.s32 %s86, 1
      %s88 = scalar_select %p85, %s86, %s87
      %p91 = pneg %p85
      %p92 = scmp.eq.s32.totalorder %s25, 1
      %p93 = por %p91, %p92
      %p94 = scmp.ne.s32.totalorder %s86, %s89
      %p95 = scmp.eq.s32.totalorder %s25, 0
      %p96 = por %p94, %p95
      %p97 = scmp.ne.s32.totalorder %s86, %s89
      %p98 = scmp.eq.s32.totalorder %s30, 1
      %p99 = por %p97, %p98
      %p100 = scmp.ne.s32.totalorder %s89, %s90
      %p101 = scmp.eq.s32.totalorder %s30, 0
      %p102 = por %p100, %p101
      %p103 = scmp.ne.s32.totalorder %s89, %s90
      %p104 = scmp.eq.s32.totalorder %s31, 1
      %p105 = por %p103, %p104
      %p107 = scmp.ne.s32.totalorder %s90, %s106
      %p108 = scmp.eq.s32.totalorder %s31, 0
      %p109 = por %p107, %p108
      %s110 = ssub.s32 %s32, %s51
      %p111 = scmp.eq.s32.totalorder %s110, 0
      %s113 = sadd.s32 %s112, 1
      %s114 = scalar_select %p111, %s112, %s113
      %p117 = pneg %p111
      %p118 = scmp.eq.s32.totalorder %s25, 1
      %p119 = por %p117, %p118
      %p120 = scmp.ne.s32.totalorder %s112, %s115
      %p121 = scmp.eq.s32.totalorder %s25, 0
      %p122 = por %p120, %p121
      %p123 = scmp.ne.s32.totalorder %s112, %s115
      %p124 = scmp.eq.s32.totalorder %s30, 1
      %p125 = por %p123, %p124
      %p126 = scmp.ne.s32.totalorder %s115, %s116
      %p127 = scmp.eq.s32.totalorder %s30, 0
      %p128 = por %p126, %p127
      %p129 = scmp.ne.s32.totalorder %s115, %s116
      %p130 = scmp.eq.s32.totalorder %s31, 1
      %p131 = por %p129, %p130
      %p133 = scmp.ne.s32.totalorder %s116, %s132
      %p134 = scmp.eq.s32.totalorder %s31, 0
      %p135 = por %p133, %p134
      %s136 = ssub.s32 %s32, %s51
      %p137 = scmp.eq.s32.totalorder %s136, 0
      %s139 = sadd.s32 %s138, 1
      %s140 = scalar_select %p137, %s138, %s139
      %p143 = pneg %p137
      %p144 = scmp.eq.s32.totalorder %s25, 1
      %p145 = por %p143, %p144
      %p146 = scmp.ne.s32.totalorder %s138, %s141
      %p147 = scmp.eq.s32.totalorder %s25, 0
      %p148 = por %p146, %p147
      %p149 = scmp.ne.s32.totalorder %s138, %s141
      %p150 = scmp.eq.s32.totalorder %s30, 1
      %p151 = por %p149, %p150
      %p152 = scmp.ne.s32.totalorder %s141, %s142
      %p153 = scmp.eq.s32.totalorder %s30, 0
      %p154 = por %p152, %p153
      %p155 = scmp.ne.s32.totalorder %s141, %s142
      %p156 = scmp.eq.s32.totalorder %s31, 1
      %p157 = por %p155, %p156
      %p159 = scmp.ne.s32.totalorder %s142, %s158
      %p160 = scmp.eq.s32.totalorder %s31, 0
      %p161 = por %p159, %p160
      %s162 = ssub.s32 %s32, %s51
      %p163 = scmp.eq.s32.totalorder %s162, 0
      %s165 = sadd.s32 %s164, 1
      %s166 = scalar_select %p163, %s164, %s165
      %p169 = pneg %p163
      %p170 = scmp.eq.s32.totalorder %s25, 1
      %p171 = por %p169, %p170
      %p172 = scmp.ne.s32.totalorder %s164, %s167
      %p173 = scmp.eq.s32.totalorder %s25, 0
      %p174 = por %p172, %p173
      %p175 = scmp.ne.s32.totalorder %s164, %s167
      %p176 = scmp.eq.s32.totalorder %s30, 1
      %p177 = por %p175, %p176
      %p178 = scmp.ne.s32.totalorder %s167, %s168
      %p179 = scmp.eq.s32.totalorder %s30, 0
      %p180 = por %p178, %p179
      %p181 = scmp.ne.s32.totalorder %s167, %s168
      %p182 = scmp.eq.s32.totalorder %s31, 1
      %p183 = por %p181, %p182
      %p185 = scmp.ne.s32.totalorder %s168, %s184
      %p186 = scmp.eq.s32.totalorder %s31, 0
      %p187 = por %p185, %p186
      %s188 = ssub.s32 %s32, %s51
      %p189 = scmp.eq.s32.totalorder %s188, 0
      %s191 = sadd.s32 %s190, 1
      %s192 = scalar_select %p189, %s190, %s191
      %p195 = pneg %p189
      %p196 = scmp.eq.s32.totalorder %s25, 1
      %p197 = por %p195, %p196
      %p198 = scmp.ne.s32.totalorder %s190, %s193
      %p199 = scmp.eq.s32.totalorder %s25, 0
      %p200 = por %p198, %p199
      %p201 = scmp.ne.s32.totalorder %s190, %s193
      %p202 = scmp.eq.s32.totalorder %s30, 1
      %p203 = por %p201, %p202
      %p204 = scmp.ne.s32.totalorder %s193, %s194
      %p205 = scmp.eq.s32.totalorder %s30, 0
      %p206 = por %p204, %p205
      %p207 = scmp.ne.s32.totalorder %s193, %s194
      %p208 = scmp.eq.s32.totalorder %s31, 1
      %p209 = por %p207, %p208
      %p211 = scmp.ne.s32.totalorder %s194, %s210
      %p212 = scmp.eq.s32.totalorder %s31, 0
      %p213 = por %p211, %p212
      %s214 = ssub.s32 %s32, %s51
      %p215 = scmp.eq.s32.totalorder %s214, 0
      %s217 = sadd.s32 %s216, 1
      %s218 = scalar_select %p215, %s216, %s217
      %p221 = pneg %p215
      %p222 = scmp.eq.s32.totalorder %s25, 1
      %p223 = por %p221, %p222
      %p224 = scmp.ne.s32.totalorder %s216, %s219
      %p225 = scmp.eq.s32.totalorder %s25, 0
      %p226 = por %p224, %p225
      %p227 = scmp.ne.s32.totalorder %s216, %s219
      %p228 = scmp.eq.s32.totalorder %s30, 1
      %p229 = por %p227, %p228
      %p230 = scmp.ne.s32.totalorder %s219, %s220
      %p231 = scmp.eq.s32.totalorder %s30, 0
      %p232 = por %p230, %p231
      %p233 = scmp.ne.s32.totalorder %s219, %s220
      %p234 = scmp.eq.s32.totalorder %s31, 1
      %p235 = por %p233, %p234
      %p237 = scmp.ne.s32.totalorder %s220, %s236
      %p238 = scmp.eq.s32.totalorder %s31, 0
      %p239 = por %p237, %p238
      %s240 = ssub.s32 %s32, %s51
      %s241 = ssub.s32 %s33, %s47
      %s242 = sor.u32 %s240, %s241
      %p243 = scmp.eq.s32.totalorder %s242, 0
      %s245 = sadd.s32 %s244, 1
      %s246 = scalar_select %p243, %s244, %s245
      %p249 = pneg %p243
      %p250 = scmp.eq.s32.totalorder %s25, 1
      %p251 = por %p249, %p250
      %p252 = scmp.ne.s32.totalorder %s244, %s247
      %p253 = scmp.eq.s32.totalorder %s25, 0
      %p254 = por %p252, %p253
      %p255 = scmp.ne.s32.totalorder %s244, %s247
      %p256 = scmp.eq.s32.totalorder %s30, 1
      %p257 = por %p255, %p256
      %p258 = scmp.ne.s32.totalorder %s247, %s248
      %p259 = scmp.eq.s32.totalorder %s30, 0
      %p260 = por %p258, %p259
      %p261 = scmp.ne.s32.totalorder %s247, %s248
      %p262 = scmp.eq.s32.totalorder %s31, 1
      %p263 = por %p261, %p262
      %p265 = scmp.ne.s32.totalorder %s248, %s264
      %p266 = scmp.eq.s32.totalorder %s31, 0
      %p267 = por %p265, %p266
      %p268 = scmp.le.s32.totalorder 1, %s25
      %p269 = scmp.lt.s32.totalorder %s25, 3
      %p270 = pnand %p268, %p269
      %p271 = pneg %p270
      // Predicated region
      $region9: #{tpu_custom_call.1} parent=5 // pred_check
        _
      $region10: #{tpu_custom_call.1} parent=5 // pred_check_branch
        %273 = sbr.rel (%p270) target = $region12
      $region11: #{tpu_custom_call.1} parent=5 // pred_region
        %s274 = ssub.s32 %s25, 1
      $region12: #{tpu_custom_call.1} parent=5 // pred_fallthru
        _
      %p275 = scmp.lt.s32.totalorder %s25, 2
      // Predicated region
      $region13: #{tpu_custom_call.1} parent=5 // pred_check
        %p276 = pneg %p275
      $region14: #{tpu_custom_call.1} parent=5 // pred_check_branch
        %278 = sbr.rel (%p276) target = $region16
      $region15: #{tpu_custom_call.1} parent=5 // pred_region
        // Predicated region
        $region17: #{tpu_custom_call.1} parent=15 // pred_check
          %p279 = pneg %p68
        $region18: #{tpu_custom_call.1} parent=15 // pred_check_branch
          %281 = sbr.rel (%p279) target = $region20
        $region19: #{tpu_custom_call.1} parent=15 // pred_region
          %s282 = sand.u32 %s58, 1
          %s283 = scalar_lea.sflag [#allocation4], %s282
          %s284 = sand.u32 %s58, 1
          %s285 = smul.addr %s284, 16
          %s286 = scalar_lea.vmem [#allocation3], %s285
          %s287 = smul.u32 8, %s33
          %s289 = ssub.s32 256, 256
          %290 = vsyncadd %s283, %s289
          %s291 = sadd.s32 %s34, %s287
          %s292 = smul.addr %s32, 8
          %s293 = sadd.s32 %s291, %s292
          %s294 = smul.addr %s293, 32
          %s295 = scalar_lea.hbm %s0, %s294
          %s296 = sshll.u32 %s286, 4
          %s297 = int_to_ptr.vmem [resolvable:$true] %s296
          %302 = dma.hbm_to_vmem [thread:$0]  %s295, 256, %s297, %s283, 32, 32, 2
        $region20: #{tpu_custom_call.1} parent=15 // pred_fallthru
          _
        // Predicated region
        $region21: #{tpu_custom_call.1} parent=15 // pred_check
          %p303 = pneg %p96
        $region22: #{tpu_custom_call.1} parent=15 // pred_check_branch
          %305 = sbr.rel (%p303) target = $region24
        $region23: #{tpu_custom_call.1} parent=15 // pred_region
          %s306 = sand.u32 %s25, 1
          %s307 = scalar_lea.sflag [#allocation7], %s306
          %s308 = sand.u32 %s86, 1
          %s309 = smul.addr %s308, 8
          %s310 = scalar_lea.vmem [#allocation6], %s309
          %s312 = ssub.s32 128, 128
          %313 = vsyncadd %s307, %s312
          %s314 = sadd.s32 %s33, %s32
          %s315 = smul.addr %s314, 128
          %s316 = scalar_lea.hbm %s1, %s315
          %s318 = sshll.u32 %s310, 4
          %s319 = int_to_ptr.vmem [resolvable:$true] %s318
          %321 = dma.hbm_to_vmem [thread:$0]  %s316, 128, %s319, %s307
        $region24: #{tpu_custom_call.1} parent=15 // pred_fallthru
          _
        // Predicated region
        $region25: #{tpu_custom_call.1} parent=15 // pred_check
          %p322 = pneg %p122
        $region26: #{tpu_custom_call.1} parent=15 // pred_check_branch
          %324 = sbr.rel (%p322) target = $region28
        $region27: #{tpu_custom_call.1} parent=15 // pred_region
          %s325 = sand.u32 %s25, 1
          %s326 = scalar_lea.sflag [#allocation7], %s325
          %s327 = sand.u32 %s112, 1
          %s328 = smul.addr %s327, 128
          %s329 = scalar_lea.vmem [#allocation8], %s328
          %s331 = ssub.s32 2048, 2048
          %332 = vsyncadd %s326, %s331
          %s333 = smul.addr %s32, 16
          %s334 = smul.addr %s333, 128
          %s335 = scalar_lea.hbm %s2, %s334
          %s336 = sshll.u32 %s329, 4
          %s337 = int_to_ptr.vmem [resolvable:$true] %s336
          %342 = dma.hbm_to_vmem [thread:$0]  %s335, 2048, %s337, %s326, 128, 128, 8
        $region28: #{tpu_custom_call.1} parent=15 // pred_fallthru
          _
        // Predicated region
        $region29: #{tpu_custom_call.1} parent=15 // pred_check
          %p343 = pneg %p148
        $region30: #{tpu_custom_call.1} parent=15 // pred_check_branch
          %345 = sbr.rel (%p343) target = $region32
        $region31: #{tpu_custom_call.1} parent=15 // pred_region
          %s346 = sand.u32 %s25, 1
          %s347 = scalar_lea.sflag [#allocation10], %s346
          %s348 = sand.u32 %s138, 1
          %s349 = smul.addr %s348, 32
          %s350 = scalar_lea.vmem [#allocation9], %s349
          %s352 = ssub.s32 512, 512
          %353 = vsyncadd %s347, %s352
          %s354 = smul.addr %s32, 4
          %s355 = smul.addr %s354, 128
          %s356 = scalar_lea.hbm %s3, %s355
          %s357 = sshll.u32 %s350, 4
          %s358 = int_to_ptr.vmem [resolvable:$true] %s357
          %363 = dma.hbm_to_vmem [thread:$0]  %s356, 512, %s358, %s347, 128, 128, 8
        $region32: #{tpu_custom_call.1} parent=15 // pred_fallthru
          _
        // Predicated region
        $region33: #{tpu_custom_call.1} parent=15 // pred_check
          %p364 = pneg %p174
        $region34: #{tpu_custom_call.1} parent=15 // pred_check_branch
          %366 = sbr.rel (%p364) target = $region36
        $region35: #{tpu_custom_call.1} parent=15 // pred_region
          %p367 = scmp.lt.s32.totalorder %s32, 1
          %s368 = scalar_select %p367, %s32, 1
          %s369 = scalar_lea.vmem %s4, %s368
        $region36: #{tpu_custom_call.1} parent=15 // pred_fallthru
          _
        // Predicated region
        $region37: #{tpu_custom_call.1} parent=15 // pred_check
          %p370 = pneg %p200
        $region38: #{tpu_custom_call.1} parent=15 // pred_check_branch
          %372 = sbr.rel (%p370) target = $region40
        $region39: #{tpu_custom_call.1} parent=15 // pred_region
          %s373 = sand.u32 %s25, 1
          %s374 = scalar_lea.sflag [#allocation10], %s373
          %s375 = sand.u32 %s190, 1
          %s376 = smul.addr %s375, 128
          %s377 = scalar_lea.vmem [#allocation11], %s376
          %s379 = ssub.s32 2048, 2048
          %380 = vsyncadd %s374, %s379
          %s381 = smul.addr %s32, 16
          %s382 = smul.addr %s381, 128
          %s383 = scalar_lea.hbm %s5, %s382
          %s384 = sshll.u32 %s377, 4
          %s385 = int_to_ptr.vmem [resolvable:$true] %s384
          %390 = dma.hbm_to_vmem [thread:$0]  %s383, 2048, %s385, %s374, 128, 128, 8
        $region40: #{tpu_custom_call.1} parent=15 // pred_fallthru
          _
        // Predicated region
        $region41: #{tpu_custom_call.1} parent=15 // pred_check
          %p391 = pneg %p226
        $region42: #{tpu_custom_call.1} parent=15 // pred_check_branch
          %393 = sbr.rel (%p391) target = $region44
        $region43: #{tpu_custom_call.1} parent=15 // pred_region
          %p394 = scmp.lt.s32.totalorder %s32, 1
          %s395 = scalar_select %p394, %s32, 1
          %s396 = scalar_lea.vmem %s6, %s395
        $region44: #{tpu_custom_call.1} parent=15 // pred_fallthru
          _
      $region16: #{tpu_custom_call.1} parent=5 // pred_fallthru
        _
      %p397 = scmp.le.s32.totalorder 1, %s25
      %p398 = scmp.lt.s32.totalorder %s25, 3
      %p399 = pnand %p397, %p398
      %p400 = pneg %p399
      // Predicated region
      $region45: #{tpu_custom_call.1} parent=5 // pred_check
        _
      $region46: #{tpu_custom_call.1} parent=5 // pred_check_branch
        %402 = sbr.rel (%p399) target = $region48
      $region47: #{tpu_custom_call.1} parent=5 // pred_region
        %s403 = ssub.s32 %s25, 1
        %s404 = sand.u32 %s61, 1
        %s405 = scalar_lea.sflag [#allocation4], %s404
        %s406 = sand.u32 %s61, 1
        %s407 = smul.addr %s406, 16
        %s408 = scalar_lea.vmem [#allocation3], %s407
        // Predicated region
        $region49: #{tpu_custom_call.1} parent=47 // pred_check
          %p409 = pneg %p74
        $region50: #{tpu_custom_call.1} parent=47 // pred_check_branch
          %411 = sbr.rel (%p409) target = $region52
        $region51: #{tpu_custom_call.1} parent=47 // pred_region
          %412 = dma.done %s405, 256
        $region52: #{tpu_custom_call.1} parent=47 // pred_fallthru
          _
        %s413 = sand.u32 %s30, 1
        %s414 = scalar_lea.sflag [#allocation7], %s413
        %s415 = sand.u32 %s89, 1
        %s416 = smul.addr %s415, 8
        %s417 = scalar_lea.vmem [#allocation6], %s416
        // Predicated region
        $region53: #{tpu_custom_call.1} parent=47 // pred_check
          %p418 = pneg %p102
        $region54: #{tpu_custom_call.1} parent=47 // pred_check_branch
          %420 = sbr.rel (%p418) target = $region56
        $region55: #{tpu_custom_call.1} parent=47 // pred_region
          %421 = dma.done %s414, 128
        $region56: #{tpu_custom_call.1} parent=47 // pred_fallthru
          _
        %s422 = sand.u32 %s30, 1
        %s423 = scalar_lea.sflag [#allocation7], %s422
        %s424 = sand.u32 %s115, 1
        %s425 = smul.addr %s424, 128
        %s426 = scalar_lea.vmem [#allocation8], %s425
        // Predicated region
        $region57: #{tpu_custom_call.1} parent=47 // pred_check
          %p427 = pneg %p128
        $region58: #{tpu_custom_call.1} parent=47 // pred_check_branch
          %429 = sbr.rel (%p427) target = $region60
        $region59: #{tpu_custom_call.1} parent=47 // pred_region
          %430 = dma.done %s423, 2048
        $region60: #{tpu_custom_call.1} parent=47 // pred_fallthru
          _
        %s431 = sand.u32 %s30, 1
        %s432 = scalar_lea.sflag [#allocation10], %s431
        %s433 = sand.u32 %s141, 1
        %s434 = smul.addr %s433, 32
        %s435 = scalar_lea.vmem [#allocation9], %s434
        // Predicated region
        $region61: #{tpu_custom_call.1} parent=47 // pred_check
          %p436 = pneg %p154
        $region62: #{tpu_custom_call.1} parent=47 // pred_check_branch
          %438 = sbr.rel (%p436) target = $region64
        $region63: #{tpu_custom_call.1} parent=47 // pred_region
          %439 = dma.done %s432, 512
        $region64: #{tpu_custom_call.1} parent=47 // pred_fallthru
          _
        %s440 = sand.u32 %s30, 1
        %s441 = scalar_lea.sflag [#allocation10], %s440
        %s442 = sand.u32 %s193, 1
        %s443 = smul.addr %s442, 128
        %s444 = scalar_lea.vmem [#allocation11], %s443
        // Predicated region
        $region65: #{tpu_custom_call.1} parent=47 // pred_check
          %p445 = pneg %p206
        $region66: #{tpu_custom_call.1} parent=47 // pred_check_branch
          %447 = sbr.rel (%p445) target = $region68
        $region67: #{tpu_custom_call.1} parent=47 // pred_region
          %448 = dma.done %s441, 2048
        $region68: #{tpu_custom_call.1} parent=47 // pred_fallthru
          _
        %s449 = sand.u32 %s61, 1
        %s450 = scalar_lea.sflag [#allocation4], %s449
        %s451 = sand.u32 %s61, 1
        %s452 = smul.addr %s451, 16
        %s453 = scalar_lea.vmem [#allocation3], %s452
        %p454 = pneg %p74
        %p455 = pneg %p71
        %s456 = sand.u32 %s30, 1
        %s457 = scalar_lea.sflag [#allocation7], %s456
        %s458 = sand.u32 %s89, 1
        %s459 = smul.addr %s458, 8
        %s460 = scalar_lea.vmem [#allocation6], %s459
        %p461 = pneg %p102
        %p462 = pneg %p99
        %s463 = sand.u32 %s30, 1
        %s464 = scalar_lea.sflag [#allocation7], %s463
        %s465 = sand.u32 %s115, 1
        %s466 = smul.addr %s465, 128
        %s467 = scalar_lea.vmem [#allocation8], %s466
        %p468 = pneg %p128
        %p469 = pneg %p125
        %s470 = sand.u32 %s30, 1
        %s471 = scalar_lea.sflag [#allocation10], %s470
        %s472 = sand.u32 %s141, 1
        %s473 = smul.addr %s472, 32
        %s474 = scalar_lea.vmem [#allocation9], %s473
        %p475 = pneg %p154
        %p476 = pneg %p151
        %p477 = scmp.lt.s32.totalorder %s35, 1
        %s478 = scalar_select %p477, %s35, 1
        %s479 = scalar_lea.vmem %s4, %s478
        %p480 = pneg %p180
        %p481 = pneg %p177
        %s482 = sand.u32 %s30, 1
        %s483 = scalar_lea.sflag [#allocation10], %s482
        %s484 = sand.u32 %s193, 1
        %s485 = smul.addr %s484, 128
        %s486 = scalar_lea.vmem [#allocation11], %s485
        %p487 = pneg %p206
        %p488 = pneg %p203
        %p489 = scmp.lt.s32.totalorder %s35, 1
        %s490 = scalar_select %p489, %s35, 1
        %s491 = scalar_lea.vmem %s6, %s490
        %p492 = pneg %p232
        %p493 = pneg %p229
        %p494 = pneg %p260
        %p495 = pneg %p257
        %s496 = sand.u32 %s247, 1
        %s497 = scalar_lea.sflag [#allocation5], %s496
        %s498 = sand.u32 %s247, 1
        %s499 = smul.addr %s498, 8
        %s500 = scalar_lea.vmem [#allocation12], %s499
        %s501 = smul.u32 8, %s36
        %p502 = scmp.lt.s32.totalorder %s35, 1
        %s503 = scalar_select %p502, %s35, 1
        %s504 = scalar_lea.vmem %s4, %s503
        %p505 = scmp.lt.s32.totalorder %s35, 1
        %s506 = scalar_select %p505, %s35, 1
        %s507 = scalar_lea.vmem %s6, %s506
        %p508 = scmp.eq.s32.totalorder %s37, 0
        // Predicated region
        $region69: #{tpu_custom_call.1} parent=47 // pred_check
          %p509 = pneg %p508
        $region70: #{tpu_custom_call.1} parent=47 // pred_check_branch
          %511 = sbr.rel (%p509) target = $region72
        $region71: #{tpu_custom_call.1} parent=47 // pred_region
          %512 = vst [vmem:[#allocation2] sm:$0xff] 0.0
        $region72: #{tpu_custom_call.1} parent=47 // pred_fallthru
          _
        %v513 = vld [vmem:[#allocation2] sm:$0xff]
        %v514 = vld [vmem:[%s408] sm:$0x3]
        %v515 = vld [vmem:[%s408 + $0x2] sm:$0x3]
        %v516 = vld [vmem:[%s408 + $0x4] sm:$0x3]
        %v517 = vld [vmem:[%s408 + $0x6] sm:$0x3]
        %v518 = vld [vmem:[%s408 + $0x8] sm:$0x3]
        %v519 = vld [vmem:[%s408 + $0xa] sm:$0x3]
        %v520 = vld [vmem:[%s408 + $0xc] sm:$0x3]
        %v521 = vld [vmem:[%s408 + $0xe] sm:$0x3]
        %vm522 = vcmask 1041408
        %v523 = vsel %vm522, %v514, 0.0
        %v524 = vrot.slane %v523, 4
        %v525 = vadd.f32 %v523, %v524
        %v526 = vrot.slane %v525, 2
        %v527 = vadd.f32 %v525, %v526
        %v528 = vrot.slane %v527, 1
        %v529 = vadd.f32 %v527, %v528
        %v530 = vsel %vm522, %v515, 0.0
        %v531 = vrot.slane %v530, 4
        %v532 = vadd.f32 %v530, %v531
        %v533 = vrot.slane %v532, 2
        %v534 = vadd.f32 %v532, %v533
        %v535 = vrot.slane %v534, 1
        %v536 = vadd.f32 %v534, %v535
        %v537 = vsel %vm522, %v516, 0.0
        %v538 = vrot.slane %v537, 4
        %v539 = vadd.f32 %v537, %v538
        %v540 = vrot.slane %v539, 2
        %v541 = vadd.f32 %v539, %v540
        %v542 = vrot.slane %v541, 1
        %v543 = vadd.f32 %v541, %v542
        %v544 = vsel %vm522, %v517, 0.0
        %v545 = vrot.slane %v544, 4
        %v546 = vadd.f32 %v544, %v545
        %v547 = vrot.slane %v546, 2
        %v548 = vadd.f32 %v546, %v547
        %v549 = vrot.slane %v548, 1
        %v550 = vadd.f32 %v548, %v549
        %v551 = vsel %vm522, %v518, 0.0
        %v552 = vrot.slane %v551, 4
        %v553 = vadd.f32 %v551, %v552
        %v554 = vrot.slane %v553, 2
        %v555 = vadd.f32 %v553, %v554
        %v556 = vrot.slane %v555, 1
        %v557 = vadd.f32 %v555, %v556
        %v558 = vsel %vm522, %v519, 0.0
        %v559 = vrot.slane %v558, 4
        %v560 = vadd.f32 %v558, %v559
        %v561 = vrot.slane %v560, 2
        %v562 = vadd.f32 %v560, %v561
        %v563 = vrot.slane %v562, 1
        %v564 = vadd.f32 %v562, %v563
        %v565 = vsel %vm522, %v520, 0.0
        %v566 = vrot.slane %v565, 4
        %v567 = vadd.f32 %v565, %v566
        %v568 = vrot.slane %v567, 2
        %v569 = vadd.f32 %v567, %v568
        %v570 = vrot.slane %v569, 1
        %v571 = vadd.f32 %v569, %v570
        %v572 = vsel %vm522, %v521, 0.0
        %v573 = vrot.slane %v572, 4
        %v574 = vadd.f32 %v572, %v573
        %v575 = vrot.slane %v574, 2
        %v576 = vadd.f32 %v574, %v575
        %v577 = vrot.slane %v576, 1
        %v578 = vadd.f32 %v576, %v577
        %vm587 = vcmask 1041409
        %v588 = vsel %vm587, %v536, %v529
        %vm589 = vcmask 1042434
        %v590 = vsel %vm589, %v543, %v588
        %vm591 = vcmask 1043459
        %v592 = vsel %vm591, %v550, %v590
        %vm593 = vcmask 1044484
        %v594 = vsel %vm593, %v557, %v592
        %vm595 = vcmask 1045509
        %v596 = vsel %vm595, %v564, %v594
        %vm597 = vcmask 1046534
        %v598 = vsel %vm597, %v571, %v596
        %vm599 = vcmask 1047559
        %v600 = vsel %vm599, %v578, %v598
        %v602 = vadd.f32 %v513, %v600
        %603 = vst [vmem:[#allocation2] sm:$0xff] %v602
        // Predicated region
        $region73: #{tpu_custom_call.1} parent=47 // pred_check
          %p604 = pneg %p508
        $region74: #{tpu_custom_call.1} parent=47 // pred_check_branch
          %606 = sbr.rel (%p604) target = $region76
        $region75: #{tpu_custom_call.1} parent=47 // pred_region
          %v607 = vld [vmem:[%s417] sm:$0xff]
          %v608 = vld [vmem:[#allocation2] sm:$0xff]
          %v609 = vld [vmem:[%s426] sm:$0xff]
          %v610 = vld [vmem:[%s426 + $0x8] sm:$0xff]
          %v611 = vld [vmem:[%s426 + $0x10] sm:$0xff]
          %v612 = vld [vmem:[%s426 + $0x18] sm:$0xff]
          %v613 = vld [vmem:[%s426 + $0x20] sm:$0xff]
          %v614 = vld [vmem:[%s426 + $0x28] sm:$0xff]
          %v615 = vld [vmem:[%s426 + $0x30] sm:$0xff]
          %v616 = vld [vmem:[%s426 + $0x38] sm:$0xff]
          %v617 = vld [vmem:[%s426 + $0x40] sm:$0xff]
          %v618 = vld [vmem:[%s426 + $0x48] sm:$0xff]
          %v619 = vld [vmem:[%s426 + $0x50] sm:$0xff]
          %v620 = vld [vmem:[%s426 + $0x58] sm:$0xff]
          %v621 = vld [vmem:[%s426 + $0x60] sm:$0xff]
          %v622 = vld [vmem:[%s426 + $0x68] sm:$0xff]
          %v623 = vld [vmem:[%s426 + $0x70] sm:$0xff]
          %v624 = vld [vmem:[%s426 + $0x78] sm:$0xff]
          %v625 = vld [vmem:[%s435] sm:$0xff]
          %v626 = vld [vmem:[%s435 + $0x8] sm:$0xff]
          %v627 = vld [vmem:[%s435 + $0x10] sm:$0xff]
          %v628 = vld [vmem:[%s435 + $0x18] sm:$0xff]
          %vm629 = vcmask 261120
          %v631 = vsel %vm629, %v607, 0
          %633 = vmatprep.subr.mxu0 0.0
          %634 = vmatpush1.msra.mxu0 %v625
          %635 = vmatprep.subr.mxu0 0.0
          %636 = vmatpush1.msra.mxu0 %v626
          %637 = vmatprep.subr.mxu0 0.0
          %638 = vmatpush1.msra.mxu0 %v627
          %639 = vmatprep.subr.mxu0 0.0
          %640 = vmatpush1.msra.mxu0 %v628
          %641 = vmatprep.subr.mxu0 0.0
          %642 = vmatpush1.msra.mxu0 0.0
          %643 = vmatprep.subr.mxu0 0.0
          %644 = vmatpush1.msra.mxu0 0.0
          %645 = vmatprep.subr.mxu0 0.0
          %646 = vmatpush1.msra.mxu0 0.0
          %647 = vmatprep.subr.mxu0 0.0
          %648 = vmatpush1.msra.mxu0 0.0
          %649 = vmatprep.subr.mxu0 0.0
          %650 = vmatpush1.msra.mxu0 0.0
          %651 = vmatprep.subr.mxu0 0.0
          %652 = vmatpush1.msra.mxu0 0.0
          %653 = vmatprep.subr.mxu0 0.0
          %654 = vmatpush1.msra.mxu0 0.0
          %655 = vmatprep.subr.mxu0 0.0
          %656 = vmatpush1.msra.mxu0 0.0
          %657 = vmatprep.subr.mxu0 0.0
          %658 = vmatpush1.msra.mxu0 0.0
          %659 = vmatprep.subr.mxu0 0.0
          %660 = vmatpush1.msra.mxu0 0.0
          %661 = vmatprep.subr.mxu0 0.0
          %662 = vmatpush1.msra.mxu0 0.0
          %663 = vmatprep.subr.mxu0 0.0
          %664 = vmatpush1.msra.mxu0 0.0
          %665 = vmatprep.subr.mxu0 0.0
          %666 = vmatpush1.msra.mxu0 0.0
          %667 = vmatprep.subr.mxu0 0.0
          %668 = vmatpush1.msra.mxu0 0.0
          %669 = vmatprep.subr.mxu0 0.0
          %670 = vmatpush1.msra.mxu0 0.0
          %671 = vmatprep.subr.mxu0 0.0
          %672 = vmatpush1.msra.mxu0 0.0
          %673 = vmatprep.subr.mxu0 0.0
          %674 = vmatpush1.msra.mxu0 0.0
          %675 = vmatprep.subr.mxu0 0.0
          %676 = vmatpush1.msra.mxu0 0.0
          %677 = vmatprep.subr.mxu0 0.0
          %678 = vmatpush1.msra.mxu0 0.0
          %679 = vmatprep.subr.mxu0 0.0
          %680 = vmatpush1.msra.mxu0 0.0
          %681 = vmatprep.subr.mxu0 0.0
          %682 = vmatpush1.msra.mxu0 0.0
          %683 = vmatprep.subr.mxu0 0.0
          %684 = vmatpush1.msra.mxu0 0.0
          %685 = vmatprep.subr.mxu0 0.0
          %686 = vmatpush1.msra.mxu0 0.0
          %687 = vmatprep.subr.mxu0 0.0
          %688 = vmatpush1.msra.mxu0 0.0
          %689 = vmatprep.subr.mxu0 0.0
          %690 = vmatpush1.msra.mxu0 0.0
          %691 = vmatprep.subr.mxu0 0.0
          %692 = vmatpush1.msra.mxu0 0.0
          %693 = vmatprep.subr.mxu0 0.0
          %694 = vmatpush1.msra.mxu0 0.0
          %695 = vmatprep.subr.mxu0 0.0
          %696 = vmatpush1.msra.mxu0 0.0
          %697 = vmatprep.mubr.f32.mxu0 0.0
          %698 = vmatmul.mubr.f32.gmra.mrb[0].mxu0 %v631
          %v699 = vpop.f32.mrb[0].mxu0
          %v700 = vadd.f32 0.0, %v699
          %v701 = vpop.f32.mrb[0].mxu0
          %702 = vdwg.mxu0
          %703 = vmatprep.subr.mxu0 0.0
          %704 = vmatpush1.msra.mxu0 %v609
          %705 = vmatprep.subr.mxu0 0.0
          %706 = vmatpush1.msra.mxu0 %v610
          %707 = vmatprep.subr.mxu0 0.0
          %708 = vmatpush1.msra.mxu0 %v611
          %709 = vmatprep.subr.mxu0 0.0
          %710 = vmatpush1.msra.mxu0 %v612
          %711 = vmatprep.subr.mxu0 0.0
          %712 = vmatpush1.msra.mxu0 %v613
          %713 = vmatprep.subr.mxu0 0.0
          %714 = vmatpush1.msra.mxu0 %v614
          %715 = vmatprep.subr.mxu0 0.0
          %716 = vmatpush1.msra.mxu0 %v615
          %717 = vmatprep.subr.mxu0 0.0
          %718 = vmatpush1.msra.mxu0 %v616
          %719 = vmatprep.subr.mxu0 0.0
          %720 = vmatpush1.msra.mxu0 %v617
          %721 = vmatprep.subr.mxu0 0.0
          %722 = vmatpush1.msra.mxu0 %v618
          %723 = vmatprep.subr.mxu0 0.0
          %724 = vmatpush1.msra.mxu0 %v619
          %725 = vmatprep.subr.mxu0 0.0
          %726 = vmatpush1.msra.mxu0 %v620
          %727 = vmatprep.subr.mxu0 0.0
          %728 = vmatpush1.msra.mxu0 %v621
          %729 = vmatprep.subr.mxu0 0.0
          %730 = vmatpush1.msra.mxu0 %v622
          %731 = vmatprep.subr.mxu0 0.0
          %732 = vmatpush1.msra.mxu0 %v623
          %733 = vmatprep.subr.mxu0 0.0
          %734 = vmatpush1.msra.mxu0 %v624
          %735 = vmatprep.subr.mxu0 0.0
          %736 = vmatpush1.msra.mxu0 0.0
          %737 = vmatprep.subr.mxu0 0.0
          %738 = vmatpush1.msra.mxu0 0.0
          %739 = vmatprep.subr.mxu0 0.0
          %740 = vmatpush1.msra.mxu0 0.0
          %741 = vmatprep.subr.mxu0 0.0
          %742 = vmatpush1.msra.mxu0 0.0
          %743 = vmatprep.subr.mxu0 0.0
          %744 = vmatpush1.msra.mxu0 0.0
          %745 = vmatprep.subr.mxu0 0.0
          %746 = vmatpush1.msra.mxu0 0.0
          %747 = vmatprep.subr.mxu0 0.0
          %748 = vmatpush1.msra.mxu0 0.0
          %749 = vmatprep.subr.mxu0 0.0
          %750 = vmatpush1.msra.mxu0 0.0
          %751 = vmatprep.subr.mxu0 0.0
          %752 = vmatpush1.msra.mxu0 0.0
          %753 = vmatprep.subr.mxu0 0.0
          %754 = vmatpush1.msra.mxu0 0.0
          %755 = vmatprep.subr.mxu0 0.0
          %756 = vmatpush1.msra.mxu0 0.0
          %757 = vmatprep.subr.mxu0 0.0
          %758 = vmatpush1.msra.mxu0 0.0
          %759 = vmatprep.subr.mxu0 0.0
          %760 = vmatpush1.msra.mxu0 0.0
          %761 = vmatprep.subr.mxu0 0.0
          %762 = vmatpush1.msra.mxu0 0.0
          %763 = vmatprep.subr.mxu0 0.0
          %764 = vmatpush1.msra.mxu0 0.0
          %765 = vmatprep.subr.mxu0 0.0
          %766 = vmatpush1.msra.mxu0 0.0
          %767 = vmatprep.mubr.f32.mxu0 0.0
          %768 = vmatmul.mubr.f32.gmra.mrb[0].mxu0 %v608
          %v769 = vpop.f32.mrb[0].mxu0
          %v770 = vadd.f32 %v700, %v769
          %v771 = vpop.f32.mrb[0].mxu0
          %772 = vdwg.mxu0
          %v773 = vld [vmem:[%s504] sm:$0x1]
          %v775 = vlaneseq
          %v776 = vshrl.u32 %v775, 7
          %v777 = vsub.s32 0, %v776
          %v778 = vrot.slane %v773, %v777
          %v780 = vadd.f32 %v770, %v778
          %v781 = vmax.f32 %v780, 0.0
          %v782 = vld [vmem:[%s444] sm:$0xff]
          %v783 = vld [vmem:[%s444 + $0x8] sm:$0xff]
          %v784 = vld [vmem:[%s444 + $0x10] sm:$0xff]
          %v785 = vld [vmem:[%s444 + $0x18] sm:$0xff]
          %v786 = vld [vmem:[%s444 + $0x20] sm:$0xff]
          %v787 = vld [vmem:[%s444 + $0x28] sm:$0xff]
          %v788 = vld [vmem:[%s444 + $0x30] sm:$0xff]
          %v789 = vld [vmem:[%s444 + $0x38] sm:$0xff]
          %v790 = vld [vmem:[%s444 + $0x40] sm:$0xff]
          %v791 = vld [vmem:[%s444 + $0x48] sm:$0xff]
          %v792 = vld [vmem:[%s444 + $0x50] sm:$0xff]
          %v793 = vld [vmem:[%s444 + $0x58] sm:$0xff]
          %v794 = vld [vmem:[%s444 + $0x60] sm:$0xff]
          %v795 = vld [vmem:[%s444 + $0x68] sm:$0xff]
          %v796 = vld [vmem:[%s444 + $0x70] sm:$0xff]
          %v797 = vld [vmem:[%s444 + $0x78] sm:$0xff]
          %v798 = vld [vmem:[%s507] sm:$0x1]
          %v800 = vlaneseq
          %v801 = vshrl.u32 %v800, 7
          %v802 = vsub.s32 0, %v801
          %v803 = vrot.slane %v798, %v802
          %805 = vmatprep.subr.mxu0 0.0
          %806 = vmatpush1.msra.mxu0 %v782
          %807 = vmatprep.subr.mxu0 0.0
          %808 = vmatpush1.msra.mxu0 %v783
          %809 = vmatprep.subr.mxu0 0.0
          %810 = vmatpush1.msra.mxu0 %v784
          %811 = vmatprep.subr.mxu0 0.0
          %812 = vmatpush1.msra.mxu0 %v785
          %813 = vmatprep.subr.mxu0 0.0
          %814 = vmatpush1.msra.mxu0 %v786
          %815 = vmatprep.subr.mxu0 0.0
          %816 = vmatpush1.msra.mxu0 %v787
          %817 = vmatprep.subr.mxu0 0.0
          %818 = vmatpush1.msra.mxu0 %v788
          %819 = vmatprep.subr.mxu0 0.0
          %820 = vmatpush1.msra.mxu0 %v789
          %821 = vmatprep.subr.mxu0 0.0
          %822 = vmatpush1.msra.mxu0 %v790
          %823 = vmatprep.subr.mxu0 0.0
          %824 = vmatpush1.msra.mxu0 %v791
          %825 = vmatprep.subr.mxu0 0.0
          %826 = vmatpush1.msra.mxu0 %v792
          %827 = vmatprep.subr.mxu0 0.0
          %828 = vmatpush1.msra.mxu0 %v793
          %829 = vmatprep.subr.mxu0 0.0
          %830 = vmatpush1.msra.mxu0 %v794
          %831 = vmatprep.subr.mxu0 0.0
          %832 = vmatpush1.msra.mxu0 %v795
          %833 = vmatprep.subr.mxu0 0.0
          %834 = vmatpush1.msra.mxu0 %v796
          %835 = vmatprep.subr.mxu0 0.0
          %836 = vmatpush1.msra.mxu0 %v797
          %837 = vmatprep.subr.mxu0 0.0
          %838 = vmatpush1.msra.mxu0 0.0
          %839 = vmatprep.subr.mxu0 0.0
          %840 = vmatpush1.msra.mxu0 0.0
          %841 = vmatprep.subr.mxu0 0.0
          %842 = vmatpush1.msra.mxu0 0.0
          %843 = vmatprep.subr.mxu0 0.0
          %844 = vmatpush1.msra.mxu0 0.0
          %845 = vmatprep.subr.mxu0 0.0
          %846 = vmatpush1.msra.mxu0 0.0
          %847 = vmatprep.subr.mxu0 0.0
          %848 = vmatpush1.msra.mxu0 0.0
          %849 = vmatprep.subr.mxu0 0.0
          %850 = vmatpush1.msra.mxu0 0.0
          %851 = vmatprep.subr.mxu0 0.0
          %852 = vmatpush1.msra.mxu0 0.0
          %853 = vmatprep.subr.mxu0 0.0
          %854 = vmatpush1.msra.mxu0 0.0
          %855 = vmatprep.subr.mxu0 0.0
          %856 = vmatpush1.msra.mxu0 0.0
          %857 = vmatprep.subr.mxu0 0.0
          %858 = vmatpush1.msra.mxu0 0.0
          %859 = vmatprep.subr.mxu0 0.0
          %860 = vmatpush1.msra.mxu0 0.0
          %861 = vmatprep.subr.mxu0 0.0
          %862 = vmatpush1.msra.mxu0 0.0
          %863 = vmatprep.subr.mxu0 0.0
          %864 = vmatpush1.msra.mxu0 0.0
          %865 = vmatprep.subr.mxu0 0.0
          %866 = vmatpush1.msra.mxu0 0.0
          %867 = vmatprep.subr.mxu0 0.0
          %868 = vmatpush1.msra.mxu0 0.0
          %869 = vmatprep.mubr.f32.mxu0 0.0
          %870 = vmatmul.mubr.f32.gmra.mrb[0].mxu0 %v781
          %v871 = vpop.f32.mrb[0].mxu0
          %v872 = vadd.f32 %v803, %v871
          %v873 = vpop.f32.mrb[0].mxu0
          %874 = vdwg.mxu0
          %875 = vst [vmem:[%s500] sm:$0xff] %v872
        $region76: #{tpu_custom_call.1} parent=47 // pred_fallthru
          _
        %s876 = sand.u32 %s247, 1
        %s877 = scalar_lea.sflag [#allocation5], %s876
        %s878 = sand.u32 %s247, 1
        %s879 = smul.addr %s878, 8
        %s880 = scalar_lea.vmem [#allocation12], %s879
        // Predicated region
        $region77: #{tpu_custom_call.1} parent=47 // pred_check
          %p881 = pneg %p257
        $region78: #{tpu_custom_call.1} parent=47 // pred_check_branch
          %883 = sbr.rel (%p881) target = $region80
        $region79: #{tpu_custom_call.1} parent=47 // pred_region
          %s885 = ssub.s32 128, 128
          %886 = vsyncadd %s877, %s885
          %s887 = sadd.s32 %s36, %s35
          %s888 = smul.addr %s887, 128
          %s889 = scalar_lea.hbm %s7, %s888
          %s891 = sshll.u32 %s880, 4
          %s892 = int_to_ptr.vmem [resolvable:$true] %s891
          %894 = dma.vmem_to_hbm [thread:$0]  %s892, 128, %s889, %s877
        $region80: #{tpu_custom_call.1} parent=47 // pred_fallthru
          _
      $region48: #{tpu_custom_call.1} parent=5 // pred_fallthru
        _
      %p895 = scmp.le.s32.totalorder 2, %s25
      // Predicated region
      $region81: #{tpu_custom_call.1} parent=5 // pred_check
        %p896 = pneg %p895
      $region82: #{tpu_custom_call.1} parent=5 // pred_check_branch
        %898 = sbr.rel (%p896) target = $region84
      $region83: #{tpu_custom_call.1} parent=5 // pred_region
        %s899 = ssub.s32 %s25, 2
        // Predicated region
        $region85: #{tpu_custom_call.1} parent=83 // pred_check
          %p900 = pneg %p263
        $region86: #{tpu_custom_call.1} parent=83 // pred_check_branch
          %902 = sbr.rel (%p900) target = $region88
        $region87: #{tpu_custom_call.1} parent=83 // pred_region
          %s903 = sand.u32 %s248, 1
          %s904 = scalar_lea.sflag [#allocation5], %s903
          %s905 = sand.u32 %s248, 1
          %s906 = smul.addr %s905, 8
          %s907 = scalar_lea.vmem [#allocation12], %s906
          %908 = dma.done %s904, 128
        $region88: #{tpu_custom_call.1} parent=83 // pred_fallthru
          _
      $region84: #{tpu_custom_call.1} parent=5 // pred_fallthru
        _
    $region6: #{tpu_custom_call.1} parent=1 // loop_footer
      %s29 = sadd.s32 1, %s25
    $region7: #{tpu_custom_call.1} parent=1 // loop_footer_branch
      %24 = sbr.rel target = $region3
    $region8: #{tpu_custom_call.1} parent=1 // loop_exit
      _
    %909 = vsyncpa [#allocation4], 1
    %s910 = scalar_lea.sflag [#allocation4], 1
    %911 = vsyncpa %s910, 1
    %912 = vsyncpa [#allocation7], 1
    %s913 = scalar_lea.sflag [#allocation7], 1
    %914 = vsyncpa %s913, 1
    %915 = vsyncpa [#allocation10], 1
    %s916 = scalar_lea.sflag [#allocation10], 1
    %917 = vsyncpa %s916, 1
    %918 = vsyncpa [#allocation5], 1
    %s919 = scalar_lea.sflag [#allocation5], 1
    %920 = vsyncpa %s919, 1

</llo_original>
